<compile_context>
chip_gen: v6e
topology: v6e:2x2x1
jax: 0.10.0
libtpu: 0.0.40
codegen_flags: <defaults>
</compile_context>

<pallas_src>
import functools

import jax
import jax.numpy as jnp
from jax.experimental import pallas as pl
from jax.experimental.pallas import tpu as pltpu


def rnn_recurrent_kernel(pre_ref, h0_ref, wh_ref, maskb_ref,
                         out_ref, hn_ref, h_scr, *,
                         t_block, t_total, hid_pad):
    """One grid step == t_block RNN timesteps.

    pre_ref  : [Tb, Bp, OF]  precomputed x@Wx + fused bias for this time block
    h0_ref   : [Bp, Hp]      initial hidden (consumed at block 0), lane-padded
    wh_ref   : [Hp, OF]      fused (i2h | i2o) weight rows for the hidden
    maskb_ref: [1, OF]       0 on logit columns [Hp, Hp+O), -1e30 elsewhere
    out_ref  : [Tb, Bp, OF]  log_softmax; valid only in columns [Hp, Hp+O)
    hn_ref   : [Bp, Hp]      final hidden (written on the last block)
    h_scr    : [Bp, Hp]      VMEM-resident hidden carried across blocks
    """
    b = pl.program_id(0)

    @pl.when(b == 0)
    def _():
        h_scr[...] = h0_ref[...]

    wh = wh_ref[...]
    maskb = maskb_ref[...]
    exact = (t_total % t_block) == 0  # static

    def step(i, h):
        # Serial critical path: one K=Hp matmul + one add per timestep.
        fused = pre_ref[i] + jnp.dot(h, wh, preferred_element_type=jnp.float32)
        if exact:
            h_new = fused[:, :hid_pad]          # lane-aligned (Hp = k*128) slice
        else:
            t = b * t_block + i
            h_new = jnp.where(t < t_total, fused[:, :hid_pad], h)
        # Masked, numerically stable log-softmax via precomputed mask-bias.
        masked = fused + maskb
        m = jnp.max(masked, axis=1, keepdims=True)
        shifted = masked - m
        lse = jnp.log(jnp.sum(jnp.exp(shifted), axis=1, keepdims=True))
        out_ref[i] = (shifted - lse).astype(out_ref.dtype)
        return h_new

    h_scr[...] = jax.lax.fori_loop(0, t_block, step, h_scr[...], unroll=True)

    @pl.when(b == pl.num_programs(0) - 1)
    def _():
        hn_ref[...] = h_scr[...]


def _fuse_params(wo, bo, wh, bh, input_size):
    """Fuse i2h/i2o into one weight with layout [H hidden | pad to Hp | O logits | pad],
    and split into input-rows (wx) / hidden-rows (whh, zero-padded to Hp rows)."""
    H = wh.shape[1]
    O = wo.shape[1]
    Hp = 128 * pl.cdiv(H, 128)
    OF = Hp + 128 * pl.cdiv(O, 128)

    wf = jnp.zeros((input_size + H, OF), jnp.float32)
    wf = wf.at[:, :H].set(wh)
    wf = wf.at[:, Hp:Hp + O].set(wo)
    bf = jnp.zeros((1, OF), jnp.float32)
    bf = bf.at[:, :H].set(bh)
    bf = bf.at[:, Hp:Hp + O].set(bo)

    wx = wf[:input_size, :]                                           # [I,  OF]
    whh = jnp.zeros((Hp, OF), jnp.float32).at[:H, :].set(wf[input_size:, :])
    maskb = jnp.full((1, OF), -1e30, jnp.float32).at[:, Hp:Hp + O].set(0.0)
    return wx, whh, bf, maskb, Hp, OF


def rnn_sequence(xs, h0, wo, bo, wh, bh, *, t_block_target=16):
    """Run the RNN cell over a whole sequence in ONE pallas_call.

    xs : [T, B, I], h0 : [B, H]  ->  (outputs [T, B, O], final hidden [B, H])
    """
    T, B, I = xs.shape
    H = wh.shape[1]
    O = wo.shape[1]
    Bp = 8 * pl.cdiv(B, 8)                       # sublane padding
    Tb = min(t_block_target, T)                  # timesteps per grid iteration
    Tp = Tb * pl.cdiv(T, Tb)

    wx, whh, bf, maskb, Hp, OF = _fuse_params(wo, bo, wh, bh, I)

    xs_p = jnp.pad(xs, ((0, Tp - T), (0, Bp - B), (0, 0)))
    h0_p = jnp.zeros((Bp, Hp), jnp.float32).at[:B, :H].set(h0)

    # Hoisted input projection (+ fused bias): one large MXU-efficient matmul,
    # independent of the recurrence.  Padded rows/timesteps just get the bias.
    pre = (xs_p.reshape(Tp * Bp, I) @ wx + bf).reshape(Tp, Bp, OF)

    kernel = functools.partial(rnn_recurrent_kernel,
                               t_block=Tb, t_total=T, hid_pad=Hp)
    out_p, hn_p = pl.pallas_call(
        kernel,
        out_shape=(
            jax.ShapeDtypeStruct((Tp, Bp, OF), jnp.float32),
            jax.ShapeDtypeStruct((Bp, Hp), jnp.float32),
        ),
        grid=(Tp // Tb,),
        in_specs=[
            pl.BlockSpec((Tb, Bp, OF), lambda b: (b, 0, 0)),   # per-block pre slab
            pl.BlockSpec((Bp, Hp), lambda b: (0, 0)),          # resident h0
            pl.BlockSpec((Hp, OF), lambda b: (0, 0)),          # resident Wh
            pl.BlockSpec((1, OF), lambda b: (0, 0)),           # resident mask-bias
        ],
        out_specs=[
            pl.BlockSpec((Tb, Bp, OF), lambda b: (b, 0, 0)),   # lane-dense output
            pl.BlockSpec((Bp, Hp), lambda b: (0, 0)),          # final hidden
        ],
        scratch_shapes=[pltpu.VMEM((Bp, Hp), jnp.float32)],
        compiler_params=pltpu.CompilerParams(
            dimension_semantics=("arbitrary",)),               # recurrence over time
    )(pre, h0_p, whh, maskb)

    outputs = out_p[:T, :B, Hp:Hp + O]
    hidden_final = hn_p[:B, :H]
    return outputs, hidden_final


def rnn_forward(x, hidden, wo, bo, wh, bh):
    """Module-equivalent single step: (log_softmax(i2o(cat)), i2h(cat))."""
    outputs, new_hidden = rnn_sequence(x[None], hidden, wo, bo, wh, bh)
    return outputs[0], new_hidden


def init_linear_params(key, in_features, out_features):
    """Deterministic init mirroring torch.nn.Linear default (uniform +/- 1/sqrt(fan_in))."""
    k_w, k_b = jax.random.split(key)
    bound = 1.0 / jnp.sqrt(jnp.float32(in_features))
    # stored as [in_features, out_features] so the kernel computes x @ W
    w = jax.random.uniform(k_w, (in_features, out_features),
                           jnp.float32, -bound, bound)
    b = jax.random.uniform(k_b, (1, out_features), jnp.float32, -bound, bound)
    return w, b


if __name__ == "__main__":
    input_size = 16
    hidden_size = 32
    output_size = 8
    batch = 2
    seq_len = 8

    key = jax.random.PRNGKey(0)
    k_x, k_seq, k_o, k_hh = jax.random.split(key, 4)

    x = jax.random.normal(k_x, (batch, input_size), jnp.float32)
    xs = jax.random.normal(k_seq, (seq_len, batch, input_size), jnp.float32)
    hidden = jnp.zeros((batch, hidden_size), jnp.float32)  # initHidden (broadcast to batch)

    wo, bo = init_linear_params(k_o, input_size + hidden_size, output_size)
    wh, bh = init_linear_params(k_hh, input_size + hidden_size, hidden_size)

    fwd = jax.jit(rnn_forward)
    seq = jax.jit(rnn_sequence)

    # --- single step (module-equivalent forward) ---------------------------
    output, new_hidden = fwd(x, hidden, wo, bo, wh, bh)
    jax.block_until_ready((output, new_hidden))

    combined = jnp.concatenate([x, hidden], axis=1)
    ref_out = jax.nn.log_softmax(combined @ wo + bo, axis=1)
    ref_hid = combined @ wh + bh
    assert bool(jnp.allclose(output, ref_out, atol=1e-5, rtol=1e-5))
    assert bool(jnp.allclose(new_hidden, ref_hid, atol=1e-5, rtol=1e-5))

    # --- fused recurrence over a sequence (one pallas_call, hidden in VMEM) -
    seq_out, seq_hid = seq(xs, hidden, wo, bo, wh, bh)
    jax.block_until_ready((seq_out, seq_hid))

    h_ref = hidden
    ref_outs = []
    for t in range(seq_len):
        c = jnp.concatenate([xs[t], h_ref], axis=1)
        ref_outs.append(jax.nn.log_softmax(c @ wo + bo, axis=1))
        h_ref = c @ wh + bh
    ref_outs = jnp.stack(ref_outs)
    assert bool(jnp.allclose(seq_out, ref_outs, atol=1e-4, rtol=1e-4))
    assert bool(jnp.allclose(seq_hid, h_ref, atol=1e-4, rtol=1e-4))

    print("KERNEL_OK")
</pallas_src>

<mosaic_0001>
module attributes {stable_mosaic.version = 11 : i64} {
  func.func @rnn_recurrent_kernel(%arg0: i32, %arg1: memref<1x8x256xf32, #tpu.memory_space<vmem>>, %arg2: memref<8x128xf32, #tpu.memory_space<vmem>>, %arg3: memref<128x256xf32, #tpu.memory_space<vmem>>, %arg4: memref<1x256xf32, #tpu.memory_space<vmem>>, %arg5: memref<1x8x256xf32, #tpu.memory_space<vmem>>, %arg6: memref<8x128xf32, #tpu.memory_space<vmem>>, %arg7: memref<8x128xf32, #tpu.memory_space<vmem>>) attributes {dimension_semantics = [#tpu.dimension_semantics<arbitrary>], iteration_bounds = array<i64: 1>, scalar_prefetch = 0 : i64, scratch_operands = 1 : i64, tpu.core_type = #tpu.core_type<tc>, window_params = [{transform_indices = @transform_0, window_bounds = array<i64: 1, 8, 256>}, {pipeline_mode = #tpu.pipeline_mode<synchronous>, transform_indices = @transform_1, window_bounds = array<i64: 8, 128>}, {pipeline_mode = #tpu.pipeline_mode<synchronous>, transform_indices = @transform_2, window_bounds = array<i64: 128, 256>}, {pipeline_mode = #tpu.pipeline_mode<synchronous>, transform_indices = @transform_3, window_bounds = array<i64: 1, 256>}, {transform_indices = @transform_4, window_bounds = array<i64: 1, 8, 256>}, {pipeline_mode = #tpu.pipeline_mode<synchronous>, transform_indices = @transform_5, window_bounds = array<i64: 8, 128>}]} {
    %c0_i32 = arith.constant 0 : i32
    %0 = arith.cmpi eq, %arg0, %c0_i32 : i32
    %1 = arith.extui %0 : i1 to i32
    %c0_i32_0 = arith.constant 0 : i32
    %2 = arith.cmpi ne, %1, %c0_i32_0 : i32
    scf.if %2 {
      %c0_17 = arith.constant 0 : index
      %c0_18 = arith.constant 0 : index
      %32 = vector.load %arg2[%c0_17, %c0_18] : memref<8x128xf32, #tpu.memory_space<vmem>>, vector<8x128xf32>
      %c0_19 = arith.constant 0 : index
      %c0_20 = arith.constant 0 : index
      %33 = vector.load %arg7[%c0_19, %c0_20] : memref<8x128xf32, #tpu.memory_space<vmem>>, vector<8x128xf32>
      tpu.vector_store %arg7[%c0_19, %c0_20], %32 {strides = array<i32>} : memref<8x128xf32, #tpu.memory_space<vmem>>, vector<8x128xf32>,
    } else {
    }
    %c0 = arith.constant 0 : index
    %c0_1 = arith.constant 0 : index
    %3 = vector.load %arg3[%c0, %c0_1] : memref<128x256xf32, #tpu.memory_space<vmem>>, vector<128x256xf32>
    %c0_2 = arith.constant 0 : index
    %c0_3 = arith.constant 0 : index
    %4 = vector.load %arg4[%c0_2, %c0_3] : memref<1x256xf32, #tpu.memory_space<vmem>>, vector<1x256xf32>
    %c0_4 = arith.constant 0 : index
    %c0_5 = arith.constant 0 : index
    %5 = vector.load %arg7[%c0_4, %c0_5] : memref<8x128xf32, #tpu.memory_space<vmem>>, vector<8x128xf32>
    %c0_i32_6 = arith.constant 0 : i32
    %6 = arith.index_cast %c0_i32_6 : i32 to index
    %c0_7 = arith.constant 0 : index
    %c0_8 = arith.constant 0 : index
    %7 = vector.load %arg1[%6, %c0_7, %c0_8] : memref<1x8x256xf32, #tpu.memory_space<vmem>>, vector<1x8x256xf32>
    %8 = vector.shape_cast %7 : vector<1x8x256xf32> to vector<8x256xf32>
    %cst = arith.constant dense<0.000000e+00> : vector<8x256xf32>
    %9 = tpu.matmul %5, %3, %cst {dimension_numbers = #tpu.dot_dimension_numbers<[1], [0], [0], [1], [0, 0, 1, 1], [], []>} : vector<8x128xf32>, vector<128x256xf32>, vector<8x256xf32> -> vector<8x256xf32>
    %10 = arith.addf %8, %9 : vector<8x256xf32>
    %11 = vector.extract_strided_slice %10 {offsets = [0, 0], sizes = [8, 128], strides = [1, 1]} : vector<8x256xf32> to vector<8x128xf32>
    %12 = vector.broadcast %4 : vector<1x256xf32> to vector<8x256xf32>
    %13 = arith.addf %10, %12 : vector<8x256xf32>
    %cst_9 = arith.constant dense<0xFF800000> : vector<8xf32>
    %14 = vector.multi_reduction <maximumf>, %13, %cst_9 [1] : vector<8x256xf32> to vector<8xf32>
    %15 = vector.shape_cast %14 : vector<8xf32> to vector<8x1xf32>
    %16 = vector.broadcast %15 : vector<8x1xf32> to vector<8x256xf32>
    %17 = arith.subf %13, %16 : vector<8x256xf32>
    %18 = math.exp %17 : vector<8x256xf32>
    %cst_10 = arith.constant dense<0.000000e+00> : vector<8xf32>
    %19 = vector.multi_reduction <add>, %18, %cst_10 [1] : vector<8x256xf32> to vector<8xf32>
    %20 = vector.shape_cast %19 : vector<8xf32> to vector<8x1xf32>
    %21 = math.log %20 : vector<8x1xf32>
    %22 = vector.broadcast %21 : vector<8x1xf32> to vector<8x256xf32>
    %23 = arith.subf %17, %22 : vector<8x256xf32>
    %24 = arith.index_cast %c0_i32_6 : i32 to index
    %c0_11 = arith.constant 0 : index
    %c0_12 = arith.constant 0 : index
    %25 = vector.load %arg5[%24, %c0_11, %c0_12] : memref<1x8x256xf32, #tpu.memory_space<vmem>>, vector<1x8x256xf32>
    %26 = vector.shape_cast %25 : vector<1x8x256xf32> to vector<8x256xf32>
    %27 = vector.shape_cast %23 : vector<8x256xf32> to vector<1x8x256xf32>
    tpu.vector_store %arg5[%24, %c0_11, %c0_12], %27 {strides = array<i32>} : memref<1x8x256xf32, #tpu.memory_space<vmem>>, vector<1x8x256xf32>,
    %c1_i32 = arith.constant 1 : i32
    %c0_13 = arith.constant 0 : index
    %c0_14 = arith.constant 0 : index
    %28 = vector.load %arg7[%c0_13, %c0_14] : memref<8x128xf32, #tpu.memory_space<vmem>>, vector<8x128xf32>
    tpu.vector_store %arg7[%c0_13, %c0_14], %11 {strides = array<i32>} : memref<8x128xf32, #tpu.memory_space<vmem>>, vector<8x128xf32>,
    %c0_i32_15 = arith.constant 0 : i32
    %29 = arith.cmpi eq, %arg0, %c0_i32_15 : i32
    %30 = arith.extui %29 : i1 to i32
    %c0_i32_16 = arith.constant 0 : i32
    %31 = arith.cmpi ne, %30, %c0_i32_16 : i32
    scf.if %31 {
      %c0_17 = arith.constant 0 : index
      %c0_18 = arith.constant 0 : index
      %32 = vector.load %arg7[%c0_17, %c0_18] : memref<8x128xf32, #tpu.memory_space<vmem>>, vector<8x128xf32>
      %c0_19 = arith.constant 0 : index
      %c0_20 = arith.constant 0 : index
      %33 = vector.load %arg6[%c0_19, %c0_20] : memref<8x128xf32, #tpu.memory_space<vmem>>, vector<8x128xf32>
      tpu.vector_store %arg6[%c0_19, %c0_20], %32 {strides = array<i32>} : memref<8x128xf32, #tpu.memory_space<vmem>>, vector<8x128xf32>,
    } else {
    }
    return
  }
  func.func @transform_0(%arg0: i32) -> (i32, i32, i32) {
    %c0_i32 = arith.constant 0 : i32
    %c0_i32_0 = arith.constant 0 : i32
    %c0_i32_1 = arith.constant 0 : i32
    return %arg0, %c0_i32, %c0_i32_0 : i32, i32, i32
  }
  func.func @transform_1(%arg0: i32) -> (i32, i32) {
    %c0_i32 = arith.constant 0 : i32
    %c0_i32_0 = arith.constant 0 : i32
    %c0_i32_1 = arith.constant 0 : i32
    return %c0_i32, %c0_i32_0 : i32, i32
  }
  func.func @transform_2(%arg0: i32) -> (i32, i32) {
    %c0_i32 = arith.constant 0 : i32
    %c0_i32_0 = arith.constant 0 : i32
    %c0_i32_1 = arith.constant 0 : i32
    return %c0_i32, %c0_i32_0 : i32, i32
  }
  func.func @transform_3(%arg0: i32) -> (i32, i32) {
    %c0_i32 = arith.constant 0 : i32
    %c0_i32_0 = arith.constant 0 : i32
    %c0_i32_1 = arith.constant 0 : i32
    return %c0_i32, %c0_i32_0 : i32, i32
  }
  func.func @transform_4(%arg0: i32) -> (i32, i32, i32) {
    %c0_i32 = arith.constant 0 : i32
    %c0_i32_0 = arith.constant 0 : i32
    %c0_i32_1 = arith.constant 0 : i32
    return %arg0, %c0_i32, %c0_i32_0 : i32, i32, i32
  }
  func.func @transform_5(%arg0: i32) -> (i32, i32) {
    %c0_i32 = arith.constant 0 : i32
    %c0_i32_0 = arith.constant 0 : i32
    %c0_i32_1 = arith.constant 0 : i32
    return %c0_i32, %c0_i32_0 : i32, i32
  }
}

</mosaic_0001>

<llo_original>
// kernel: rnn_forward.1
$region0: #{rnn_forward.1}
  #allocation0 [shape = 'u32[]', space=smem, size = 0x4, offset = 0x4, fixed_abs, tag = 'smem constant byte address 0x4 - core index']
  #allocation1 [shape = 'u32[144,128]{1,0:T(1,128)}', space=vmem, size = 0x12000, scoped, tag = 'internal scratch']
  #allocation2 [shape = 'f32[8,128]{1,0:T(8,128)}', space=vmem, size = 0x1000, scoped, tag = 'scratch operand']
  %s0 = inlined_call_operand.vmem [shape: f32[1,8,256], index: 0, kind: input, shape index: {}]
  %s1 = inlined_call_operand.vmem [shape: f32[8,128], index: 1, kind: input, shape index: {}]
  %s2 = inlined_call_operand.vmem [shape: f32[128,256], index: 2, kind: input, shape index: {}]
  %s3 = inlined_call_operand.vmem [shape: f32[1,256], index: 3, kind: input, shape index: {}]
  %s4 = inlined_call_operand.vmem [shape: f32[1,8,256], index: 4, kind: output, shape index: {0}]
  %s5 = inlined_call_operand.vmem [shape: f32[8,128], index: 5, kind: output, shape index: {1}]
  %6 = xla_tuple %s4, %s5
  %s7 = sld [smem:[#allocation0]]
  $region42: #{rnn_forward.1} parent=0
    _
  %s9 = ssub.s32 1, %s7
  %s10 = scalar_select 0, %s9, %s7
  // Predicated region
  $region2: #{rnn_forward.1} parent=0 // pred_check
    _
  $region3: #{rnn_forward.1} parent=0 // pred_check_branch
    %12 = sbr.rel (0) target = $region5
  $region4: #{rnn_forward.1} parent=0 // pred_region
    _
  $region5: #{rnn_forward.1} parent=0 // pred_fallthru
    _
  // Predicated region
  $region6: #{rnn_forward.1} parent=0 // pred_check
    _
  $region7: #{rnn_forward.1} parent=0 // pred_check_branch
    %14 = sbr.rel (0) target = $region9
  $region8: #{rnn_forward.1} parent=0 // pred_region
    _
  $region9: #{rnn_forward.1} parent=0 // pred_fallthru
    _
  // Predicated region
  $region10: #{rnn_forward.1} parent=0 // pred_check
    _
  $region11: #{rnn_forward.1} parent=0 // pred_check_branch
    %16 = sbr.rel (0) target = $region13
  $region12: #{rnn_forward.1} parent=0 // pred_region
    _
  $region13: #{rnn_forward.1} parent=0 // pred_fallthru
    _
  // Predicated region
  $region14: #{rnn_forward.1} parent=0 // pred_check
    _
  $region15: #{rnn_forward.1} parent=0 // pred_check_branch
    %18 = sbr.rel (0) target = $region17
  $region16: #{rnn_forward.1} parent=0 // pred_region
    _
  $region17: #{rnn_forward.1} parent=0 // pred_fallthru
    _
  %p19 = scmp.eq.s32.totalorder 0, 0
  // Predicated region
  $region18: #{rnn_forward.1} parent=0 // pred_check
    %p20 = pneg %p19
  $region19: #{rnn_forward.1} parent=0 // pred_check_branch
    %22 = sbr.rel (%p20) target = $region21
  $region20: #{rnn_forward.1} parent=0 // pred_region
    %v23 = vld [vmem:[%s1] sm:$0xff]
    %24 = vst [vmem:[#allocation2] sm:$0xff] %v23
  $region21: #{rnn_forward.1} parent=0 // pred_fallthru
    _
  %v25 = vld [vmem:[%s2] sm:$0xff]
  %v26 = vld [vmem:[%s2 + $0x8] sm:$0xff]
  %v27 = vld [vmem:[%s2 + $0x10] sm:$0xff]
  %v28 = vld [vmem:[%s2 + $0x18] sm:$0xff]
  %v29 = vld [vmem:[%s2 + $0x20] sm:$0xff]
  %v30 = vld [vmem:[%s2 + $0x28] sm:$0xff]
  %v31 = vld [vmem:[%s2 + $0x30] sm:$0xff]
  %v32 = vld [vmem:[%s2 + $0x38] sm:$0xff]
  %v33 = vld [vmem:[%s2 + $0x40] sm:$0xff]
  %v34 = vld [vmem:[%s2 + $0x48] sm:$0xff]
  %v35 = vld [vmem:[%s2 + $0x50] sm:$0xff]
  %v36 = vld [vmem:[%s2 + $0x58] sm:$0xff]
  %v37 = vld [vmem:[%s2 + $0x60] sm:$0xff]
  %v38 = vld [vmem:[%s2 + $0x68] sm:$0xff]
  %v39 = vld [vmem:[%s2 + $0x70] sm:$0xff]
  %v40 = vld [vmem:[%s2 + $0x78] sm:$0xff]
  %v41 = vld [vmem:[%s2 + $0x80] sm:$0xff]
  %v42 = vld [vmem:[%s2 + $0x88] sm:$0xff]
  %v43 = vld [vmem:[%s2 + $0x90] sm:$0xff]
  %v44 = vld [vmem:[%s2 + $0x98] sm:$0xff]
  %v45 = vld [vmem:[%s2 + $0xa0] sm:$0xff]
  %v46 = vld [vmem:[%s2 + $0xa8] sm:$0xff]
  %v47 = vld [vmem:[%s2 + $0xb0] sm:$0xff]
  %v48 = vld [vmem:[%s2 + $0xb8] sm:$0xff]
  %v49 = vld [vmem:[%s2 + $0xc0] sm:$0xff]
  %v50 = vld [vmem:[%s2 + $0xc8] sm:$0xff]
  %v51 = vld [vmem:[%s2 + $0xd0] sm:$0xff]
  %v52 = vld [vmem:[%s2 + $0xd8] sm:$0xff]
  %v53 = vld [vmem:[%s2 + $0xe0] sm:$0xff]
  %v54 = vld [vmem:[%s2 + $0xe8] sm:$0xff]
  %v55 = vld [vmem:[%s2 + $0xf0] sm:$0xff]
  %v56 = vld [vmem:[%s2 + $0xf8] sm:$0xff]
  %v57 = vld [vmem:[%s3] sm:$0x3]
  %v58 = vld [vmem:[#allocation2] sm:$0xff]
  %v59 = vld [vmem:[%s0] sm:$0xff]
  %v60 = vld [vmem:[%s0 + $0x8] sm:$0xff]
  %61 = vmatprep.subr.mxu0 %v56
  %62 = vmatpush1.msra.mxu0 %v55
  %63 = vmatprep.subr.mxu0 %v54
  %64 = vmatpush1.msra.mxu0 %v53
  %65 = vmatprep.subr.mxu0 %v52
  %66 = vmatpush1.msra.mxu0 %v51
  %67 = vmatprep.subr.mxu0 %v50
  %68 = vmatpush1.msra.mxu0 %v49
  %69 = vmatprep.subr.mxu0 %v48
  %70 = vmatpush1.msra.mxu0 %v47
  %71 = vmatprep.subr.mxu0 %v46
  %72 = vmatpush1.msra.mxu0 %v45
  %73 = vmatprep.subr.mxu0 %v44
  %74 = vmatpush1.msra.mxu0 %v43
  %75 = vmatprep.subr.mxu0 %v42
  %76 = vmatpush1.msra.mxu0 %v41
  %77 = vmatprep.subr.mxu0 %v40
  %78 = vmatpush1.msra.mxu0 %v39
  %79 = vmatprep.subr.mxu0 %v38
  %80 = vmatpush1.msra.mxu0 %v37
  %81 = vmatprep.subr.mxu0 %v36
  %82 = vmatpush1.msra.mxu0 %v35
  %83 = vmatprep.subr.mxu0 %v34
  %84 = vmatpush1.msra.mxu0 %v33
  %85 = vmatprep.subr.mxu0 %v32
  %86 = vmatpush1.msra.mxu0 %v31
  %87 = vmatprep.subr.mxu0 %v30
  %88 = vmatpush1.msra.mxu0 %v29
  %89 = vmatprep.subr.mxu0 %v28
  %90 = vmatpush1.msra.mxu0 %v27
  %91 = vmatprep.subr.mxu0 %v26
  %92 = vmatpush1.msra.mxu0 %v25
  %93 = vmatprep.subr.mxu0 0.0
  %94 = vmatpush2.msra.mxu0 0.0
  %95 = vmatprep.subr.mxu0 0.0
  %96 = vmatpush2.msra.mxu0 0.0
  %97 = vmatprep.subr.mxu0 0.0
  %98 = vmatpush2.msra.mxu0 0.0
  %99 = vmatprep.subr.mxu0 0.0
  %100 = vmatpush2.msra.mxu0 0.0
  %101 = vmatprep.subr.mxu0 0.0
  %102 = vmatpush2.msra.mxu0 0.0
  %103 = vmatprep.subr.mxu0 0.0
  %104 = vmatpush2.msra.mxu0 0.0
  %105 = vmatprep.subr.mxu0 0.0
  %106 = vmatpush2.msra.mxu0 0.0
  %107 = vmatprep.subr.mxu0 0.0
  %108 = vmatpush2.msra.mxu0 0.0
  %109 = vmatprep.subr.mxu0 0.0
  %110 = vmatpush2.msra.mxu0 0.0
  %111 = vmatprep.subr.mxu0 0.0
  %112 = vmatpush2.msra.mxu0 0.0
  %113 = vmatprep.subr.mxu0 0.0
  %114 = vmatpush2.msra.mxu0 0.0
  %115 = vmatprep.subr.mxu0 0.0
  %116 = vmatpush2.msra.mxu0 0.0
  %117 = vmatprep.subr.mxu0 0.0
  %118 = vmatpush2.msra.mxu0 0.0
  %119 = vmatprep.subr.mxu0 0.0
  %120 = vmatpush2.msra.mxu0 0.0
  %121 = vmatprep.subr.mxu0 0.0
  %122 = vmatpush2.msra.mxu0 0.0
  %123 = vmatprep.subr.mxu0 0.0
  %124 = vmatpush2.msra.mxu0 0.0
  %125 = vmatprep.mubr.f32.mxu0 0.0
  %126 = vmatmul.mubr.f32.gmra.mxu0 %v58
  %v127 = vpop.f32.mrf.mxu0
  %v128 = vadd.f32 0.0, %v127
  %v129 = vpop.f32.mrf.mxu0
  %v130 = vadd.f32 0.0, %v129
  %131 = vdwg.mxu0
  %v132 = vadd.f32 %v59, %v128
  %v133 = vadd.f32 %v60, %v130
  %v135 = vlaneseq
  %v136 = vshrl.u32 %v135, 7
  %v137 = vsub.s32 0, %v136
  %v138 = vrot.slane %v57, %v137
  %v139 = vlaneseq
  %v140 = vshrl.u32 %v139, 7
  %v141 = vsub.s32 1, %v140
  %v142 = vrot.slane %v57, %v141
  %v145 = vadd.f32 %v132, %v138
  %v146 = vadd.f32 %v133, %v142
  %v147 = vmax.f32 %v145, %v146
  %148 = vmax.xlane.f32.xlu0 %v147
  %v149 = vpop.xlane.xlu0 %148
  %v150 = vsub.f32 %v145, %v149
  %v151 = vsub.f32 %v146, %v149
  %v152 = vmul.f32 %v150, 1.442695
  %v153 = vpow.pop %v152
  %v154 = vmul.f32 %v151, 1.442695
  %v155 = vpow.pop %v154
  %v156 = vadd.f32 %v153, %v155
  %157 = vadd.xlane.f32.xlu0 %v156
  %v158 = vpop.xlane.xlu0 %157
  %v159 = vlog2.pop %v158
  %v160 = vmul.f32 %v159, 0.6931472
  %v161 = vsub.f32 %v150, %v160
  %v162 = vsub.f32 %v151, %v160
  %163 = vst [vmem:[%s4] sm:$0xff] %v161
  %164 = vst [vmem:[%s4 + $0x8] sm:$0xff] %v162
  %165 = vst [vmem:[#allocation2] sm:$0xff] %v132
  // Predicated region
  $region22: #{rnn_forward.1} parent=0 // pred_check
    %p166 = pneg %p19
  $region23: #{rnn_forward.1} parent=0 // pred_check_branch
    %168 = sbr.rel (%p166) target = $region25
  $region24: #{rnn_forward.1} parent=0 // pred_region
    %v169 = vld [vmem:[#allocation2] sm:$0xff]
    %170 = vst [vmem:[%s5] sm:$0xff] %v169
  $region25: #{rnn_forward.1} parent=0 // pred_fallthru
    _
  // Predicated region
  $region26: #{rnn_forward.1} parent=0 // pred_check
    _
  $region27: #{rnn_forward.1} parent=0 // pred_check_branch
    %172 = sbr.rel (0) target = $region29
  $region28: #{rnn_forward.1} parent=0 // pred_region
    _
  $region29: #{rnn_forward.1} parent=0 // pred_fallthru
    _
  // Predicated region
  $region30: #{rnn_forward.1} parent=0 // pred_check
    _
  $region31: #{rnn_forward.1} parent=0 // pred_check_branch
    %174 = sbr.rel (0) target = $region33
  $region32: #{rnn_forward.1} parent=0 // pred_region
    _
  $region33: #{rnn_forward.1} parent=0 // pred_fallthru
    _
  // Predicated region
  $region34: #{rnn_forward.1} parent=0 // pred_check
    _
  $region35: #{rnn_forward.1} parent=0 // pred_check_branch
    %176 = sbr.rel (0) target = $region37
  $region36: #{rnn_forward.1} parent=0 // pred_region
    _
  $region37: #{rnn_forward.1} parent=0 // pred_fallthru
    _
  // Predicated region
  $region38: #{rnn_forward.1} parent=0 // pred_check
    _
  $region39: #{rnn_forward.1} parent=0 // pred_check_branch
    %178 = sbr.rel (0) target = $region41
  $region40: #{rnn_forward.1} parent=0 // pred_region
    _
  $region41: #{rnn_forward.1} parent=0 // pred_fallthru
    _

</llo_original>
